<compile_context>
chip_gen: v7x
topology: tpu7x:2x2x1
jax: 0.10.0
libtpu: 0.0.40
codegen_flags: <defaults>
</compile_context>

<pallas_src>
import functools

import numpy as np
import jax
import jax.numpy as jnp
from jax import lax
from jax.experimental import pallas as pl
from jax.experimental.pallas import tpu as pltpu


def _round_up(v, m):
    return ((v + m - 1) // m) * m


def _pick_tq(n, cap):
    """Largest multiple of 128 that divides N and is <= cap; else full N."""
    cap = max(128, (cap // 128) * 128)
    if n <= cap or n % 128 != 0:
        return n
    tq = cap
    while n % tq:
        tq -= 128
    return tq


# ------------------------------- Pallas kernel --------------------------------
def _self_attn_kernel(xf_ref, xq_ref, wq_ref, bq_ref, wkv_ref, bkv_ref,
                      gamma_ref, out_ref, attn_ref, *, c8p):
    # xf_ref  : (1, C, N)      full feature map (resident per batch)
    # xq_ref  : (1, C, TQ)     query columns of this tile (same array, tiled)
    # wq_ref  : (C8P, C)       zero-padded query weights  ; bq_ref: (C8P, 1)
    # wkv_ref : (C8P + C, C)   fused [Wk(pad); Wv] weights; bkv_ref: (C8P + C, 1)
    # gamma   : (1, 1) scalar in SMEM
    # out_ref : (1, C, TQ) ; attn_ref : (1, TQ, N)
    x = xf_ref[0]                                                     # (C, N)
    x_q = xq_ref[0]                                                   # (C, TQ)

    # Fused K|V projection: one MXU pass over the resident feature map.
    kv = jnp.dot(wkv_ref[...], x, preferred_element_type=jnp.float32) \
        + bkv_ref[...]                                                # (C8P+C, N)
    k = kv[:c8p, :]                                                   # (C8P, N)  pad rows are 0
    v = kv[c8p:, :]                                                   # (C,   N)

    # Q projection only for this query tile.
    q = jnp.dot(wq_ref[...], x_q, preferred_element_type=jnp.float32) \
        + bq_ref[...]                                                 # (C8P, TQ)

    # energy[i, j] = sum_c q[c, i] * k[c, j]   (contract the channel axis)
    energy = lax.dot_general(q, k, (((0,), (0,)), ((), ())),
                             preferred_element_type=jnp.float32)      # (TQ, N)

    # Numerically-stable softmax over keys: N reciprocals + N^2 muls
    # instead of N^2 divides.
    m = jnp.max(energy, axis=-1, keepdims=True)
    e = jnp.exp(energy - m)
    inv = pl.reciprocal(jnp.sum(e, axis=-1, keepdims=True), approx=False)
    attn = e * inv                                                    # (TQ, N)

    # out[c, i] = sum_j v[c, j] * attn[i, j]   (rhs-transposed matmul)
    out_ct = lax.dot_general(v, attn, (((1,), (1,)), ((), ())),
                             preferred_element_type=jnp.float32)      # (C, TQ)

    gamma = gamma_ref[0, 0]
    out_ref[0] = (gamma * out_ct + x_q.astype(jnp.float32)).astype(out_ref.dtype)
    attn_ref[0] = attn.astype(attn_ref.dtype)


# --------------------------------- wrapper -------------------------------------
def self_attn_forward(x, params, *, tq_cap=256, attn_dtype=jnp.float32):
    """x: (B, C, W, H) float32 -> (out (B, C, W, H), attention (B, N, N))."""
    B, C, Wd, Hd = x.shape
    N = Wd * Hd
    C8 = max(C // 8, 1)
    C8P = _round_up(C8, 8)        # sublane-aligned row count for q/k weights

    wq, bq = params["wq"], params["bq"]   # (C8, C), (C8,)
    wk, bk = params["wk"], params["bk"]   # (C8, C), (C8,)
    wv, bv = params["wv"], params["bv"]   # (C,  C), (C,)
    gamma = params["gamma"]               # scalar

    # Channels-first end-to-end: (B,C,W,H) -> (B,C,N) is a free reshape; the
    # kernel writes (B,C,N) directly so the reshape back is free too.
    x_cn = x.reshape(B, C, N)

    f32 = jnp.float32
    wq_p = jnp.zeros((C8P, C), f32).at[:C8].set(wq.astype(f32))
    bq_p = jnp.zeros((C8P, 1), f32).at[:C8, 0].set(bq.astype(f32))
    wk_p = jnp.zeros((C8P, C), f32).at[:C8].set(wk.astype(f32))
    bk_p = jnp.zeros((C8P, 1), f32).at[:C8, 0].set(bk.astype(f32))
    wkv = jnp.concatenate([wk_p, wv.astype(f32)], axis=0)             # (C8P+C, C)
    bkv = jnp.concatenate([bk_p, bv.astype(f32).reshape(C, 1)], 0)    # (C8P+C, 1)
    gamma2 = jnp.asarray(gamma, f32).reshape(1, 1)

    # Query-row tile (multiple of 128 that divides N; full N for small/odd maps).
    TQ = _pick_tq(N, tq_cap)
    n_q_tiles = N // TQ

    # Rough per-step VMEM need; raise the scoped limit (with headroom, capped
    # under v7x's 64 MiB physical VMEM) only when the default would be tight.
    est = 4 * (2 * C * N            # resident x (double-buffered)
               + 2 * C * TQ         # x query tile
               + 2 * C * TQ         # out block
               + 2 * TQ * N         # attn block
               + (C8P + C) * N      # kv intermediate
               + 3 * TQ * N         # energy / exp / attn temporaries
               + 2 * (2 * C8P + C) * (C + 1))
    cp_kwargs = dict(dimension_semantics=("parallel", "parallel"))
    if est > 12 * 1024 * 1024:
        cp_kwargs["vmem_limit_bytes"] = min(
            max(int(est * 1.5), 32 * 1024 * 1024), 56 * 1024 * 1024)

    kernel = functools.partial(_self_attn_kernel, c8p=C8P)

    out_cn, attn = pl.pallas_call(
        kernel,
        out_shape=(
            jax.ShapeDtypeStruct((B, C, N), x.dtype),
            jax.ShapeDtypeStruct((B, N, N), attn_dtype),
        ),
        grid=(B, n_q_tiles),
        in_specs=[
            pl.BlockSpec((1, C, N), lambda b, t: (b, 0, 0)),        # x, resident per batch
            pl.BlockSpec((1, C, TQ), lambda b, t: (b, 0, t)),       # x query columns
            pl.BlockSpec((C8P, C), lambda b, t: (0, 0)),            # Wq (padded, resident)
            pl.BlockSpec((C8P, 1), lambda b, t: (0, 0)),            # bq
            pl.BlockSpec((C8P + C, C), lambda b, t: (0, 0)),        # fused [Wk;Wv]
            pl.BlockSpec((C8P + C, 1), lambda b, t: (0, 0)),        # fused [bk;bv]
            pl.BlockSpec(memory_space=pltpu.MemorySpace.SMEM),      # gamma scalar
        ],
        out_specs=(
            pl.BlockSpec((1, C, TQ), lambda b, t: (b, 0, t)),       # out (lane-dense in N)
            pl.BlockSpec((1, TQ, N), lambda b, t: (b, t, 0)),       # attention tile
        ),
        compiler_params=pltpu.CompilerParams(**cp_kwargs),
    )(x_cn, x_cn, wq_p, bq_p, wkv, bkv, gamma2)

    out = out_cn.reshape(B, C, Wd, Hd)   # free reshape, no transpose
    return out, attn


# ---------------------------- pure-JAX reference -------------------------------
def self_attn_ref(x, params):
    B, C, Wd, Hd = x.shape
    N = Wd * Hd
    xf = x.reshape(B, C, N)
    q = jnp.einsum('oc,bcn->bon', params["wq"], xf) + params["bq"][None, :, None]
    k = jnp.einsum('oc,bcn->bon', params["wk"], xf) + params["bk"][None, :, None]
    v = jnp.einsum('oc,bcn->bon', params["wv"], xf) + params["bv"][None, :, None]
    energy = jnp.einsum('bci,bcj->bij', q, k)          # bmm(q^T, k)
    attn = jax.nn.softmax(energy, axis=-1)
    out = jnp.einsum('bcj,bij->bci', v, attn)          # bmm(v, attn^T)
    out = out.reshape(B, C, Wd, Hd)
    out = params["gamma"] * out + x
    return out, attn


if __name__ == "__main__":
    B, C, Wd, Hd = 2, 32, 8, 8          # in_dim=32 -> C//8 = 4; N = 64
    C8 = C // 8
    key = jax.random.PRNGKey(0)
    keys = jax.random.split(key, 7)
    scale = 0.1
    params = dict(
        wq=scale * jax.random.normal(keys[0], (C8, C), jnp.float32),
        bq=scale * jax.random.normal(keys[1], (C8,), jnp.float32),
        wk=scale * jax.random.normal(keys[2], (C8, C), jnp.float32),
        bk=scale * jax.random.normal(keys[3], (C8,), jnp.float32),
        wv=scale * jax.random.normal(keys[4], (C, C), jnp.float32),
        bv=scale * jax.random.normal(keys[5], (C,), jnp.float32),
        # PyTorch initializes gamma to 0 (out == x); use a nonzero value so the
        # attention path is actually exercised by the numeric check.
        gamma=jnp.float32(0.7),
    )
    x = jax.random.normal(keys[6], (B, C, Wd, Hd), dtype=jnp.float32)

    out, attn = self_attn_forward(x, params)
    out = jax.block_until_ready(out)
    attn = jax.block_until_ready(attn)

    out_ref, attn_ref = self_attn_ref(x, params)
    assert out.shape == (B, C, Wd, Hd), out.shape
    assert attn.shape == (B, Wd * Hd, Wd * Hd), attn.shape
    np.testing.assert_allclose(np.asarray(attn), np.asarray(attn_ref), rtol=1e-5, atol=1e-5)
    np.testing.assert_allclose(np.asarray(out), np.asarray(out_ref), rtol=1e-5, atol=1e-5)

    print("KERNEL_OK")
</pallas_src>

<mosaic_0001>
module attributes {stable_mosaic.version = 11 : i64} {
  func.func @_self_attn_kernel(%arg0: i32, %arg1: i32, %arg2: memref<1x32x64xf32, #tpu.memory_space<vmem>>, %arg3: memref<1x32x64xf32, #tpu.memory_space<vmem>>, %arg4: memref<8x32xf32, #tpu.memory_space<vmem>>, %arg5: memref<8x1xf32, #tpu.memory_space<vmem>>, %arg6: memref<40x32xf32, #tpu.memory_space<vmem>>, %arg7: memref<40x1xf32, #tpu.memory_space<vmem>>, %arg8: memref<1x1xf32, #tpu.memory_space<smem>>, %arg9: memref<1x32x64xf32, #tpu.memory_space<vmem>>, %arg10: memref<1x64x64xf32, #tpu.memory_space<vmem>>) attributes {dimension_semantics = [#tpu.dimension_semantics<parallel>, #tpu.dimension_semantics<parallel>], iteration_bounds = array<i64: 2, 1>, scalar_prefetch = 0 : i64, scratch_operands = 0 : i64, tpu.core_type = #tpu.core_type<tc>, window_params = [{transform_indices = @transform_0, window_bounds = array<i64: 1, 32, 64>}, {transform_indices = @transform_1, window_bounds = array<i64: 1, 32, 64>}, {pipeline_mode = #tpu.pipeline_mode<synchronous>, transform_indices = @transform_2, window_bounds = array<i64: 8, 32>}, {pipeline_mode = #tpu.pipeline_mode<synchronous>, transform_indices = @transform_3, window_bounds = array<i64: 8, 1>}, {pipeline_mode = #tpu.pipeline_mode<synchronous>, transform_indices = @transform_4, window_bounds = array<i64: 40, 32>}, {pipeline_mode = #tpu.pipeline_mode<synchronous>, transform_indices = @transform_5, window_bounds = array<i64: 40, 1>}, {transform_indices = @transform_6, window_bounds = array<i64: 1, 1>}, {transform_indices = @transform_7, window_bounds = array<i64: 1, 32, 64>}, {transform_indices = @transform_8, window_bounds = array<i64: 1, 64, 64>}]} {
    %c0 = arith.constant 0 : index
    %c0_0 = arith.constant 0 : index
    %c0_1 = arith.constant 0 : index
    %0 = vector.load %arg2[%c0, %c0_0, %c0_1] : memref<1x32x64xf32, #tpu.memory_space<vmem>>, vector<1x32x64xf32>
    %1 = vector.shape_cast %0 : vector<1x32x64xf32> to vector<32x64xf32>
    %c0_2 = arith.constant 0 : index
    %c0_3 = arith.constant 0 : index
    %c0_4 = arith.constant 0 : index
    %2 = vector.load %arg3[%c0_2, %c0_3, %c0_4] : memref<1x32x64xf32, #tpu.memory_space<vmem>>, vector<1x32x64xf32>
    %3 = vector.shape_cast %2 : vector<1x32x64xf32> to vector<32x64xf32>
    %c0_5 = arith.constant 0 : index
    %c0_6 = arith.constant 0 : index
    %4 = vector.load %arg6[%c0_5, %c0_6] : memref<40x32xf32, #tpu.memory_space<vmem>>, vector<40x32xf32>
    %cst = arith.constant dense<0.000000e+00> : vector<40x64xf32>
    %5 = tpu.matmul %4, %1, %cst {dimension_numbers = #tpu.dot_dimension_numbers<[1], [0], [0], [1], [0, 0, 1, 1], [], []>} : vector<40x32xf32>, vector<32x64xf32>, vector<40x64xf32> -> vector<40x64xf32>
    %c0_7 = arith.constant 0 : index
    %c0_8 = arith.constant 0 : index
    %6 = vector.load %arg7[%c0_7, %c0_8] : memref<40x1xf32, #tpu.memory_space<vmem>>, vector<40x1xf32>
    %7 = vector.broadcast %6 : vector<40x1xf32> to vector<40x64xf32>
    %8 = arith.addf %5, %7 : vector<40x64xf32>
    %9 = vector.extract_strided_slice %8 {offsets = [0, 0], sizes = [8, 64], strides = [1, 1]} : vector<40x64xf32> to vector<8x64xf32>
    %10 = vector.extract_strided_slice %8 {offsets = [8, 0], sizes = [32, 64], strides = [1, 1]} : vector<40x64xf32> to vector<32x64xf32>
    %c0_9 = arith.constant 0 : index
    %c0_10 = arith.constant 0 : index
    %11 = vector.load %arg4[%c0_9, %c0_10] : memref<8x32xf32, #tpu.memory_space<vmem>>, vector<8x32xf32>
    %cst_11 = arith.constant dense<0.000000e+00> : vector<8x64xf32>
    %12 = tpu.matmul %11, %3, %cst_11 {dimension_numbers = #tpu.dot_dimension_numbers<[1], [0], [0], [1], [0, 0, 1, 1], [], []>} : vector<8x32xf32>, vector<32x64xf32>, vector<8x64xf32> -> vector<8x64xf32>
    %c0_12 = arith.constant 0 : index
    %c0_13 = arith.constant 0 : index
    %13 = vector.load %arg5[%c0_12, %c0_13] : memref<8x1xf32, #tpu.memory_space<vmem>>, vector<8x1xf32>
    %14 = vector.broadcast %13 : vector<8x1xf32> to vector<8x64xf32>
    %15 = arith.addf %12, %14 : vector<8x64xf32>
    %cst_14 = arith.constant dense<0.000000e+00> : vector<64x64xf32>
    %16 = tpu.matmul %15, %9, %cst_14 {dimension_numbers = #tpu.dot_dimension_numbers<[0], [0], [1], [1], [0, 1, 1, 1], [], []>} : vector<8x64xf32>, vector<8x64xf32>, vector<64x64xf32> -> vector<64x64xf32>
    %cst_15 = arith.constant dense<0xFF800000> : vector<64xf32>
    %17 = vector.multi_reduction <maximumf>, %16, %cst_15 [1] : vector<64x64xf32> to vector<64xf32>
    %18 = vector.shape_cast %17 : vector<64xf32> to vector<64x1xf32>
    %19 = vector.broadcast %18 : vector<64x1xf32> to vector<64x64xf32>
    %20 = arith.subf %16, %19 : vector<64x64xf32>
    %21 = math.exp %20 : vector<64x64xf32>
    %cst_16 = arith.constant dense<0.000000e+00> : vector<64xf32>
    %22 = vector.multi_reduction <add>, %21, %cst_16 [1] : vector<64x64xf32> to vector<64xf32>
    %23 = vector.shape_cast %22 : vector<64xf32> to vector<64x1xf32>
    %24 = tpu.reciprocal %23 : vector<64x1xf32> -> vector<64x1xf32>
    %25 = vector.broadcast %24 : vector<64x1xf32> to vector<64x64xf32>
    %26 = arith.mulf %21, %25 : vector<64x64xf32>
    %cst_17 = arith.constant dense<0.000000e+00> : vector<32x64xf32>
    %27 = tpu.matmul %10, %26, %cst_17 {dimension_numbers = #tpu.dot_dimension_numbers<[1], [1], [0], [0], [0, 0, 1, 0], [], []>} : vector<32x64xf32>, vector<64x64xf32>, vector<32x64xf32> -> vector<32x64xf32>
    %c0_18 = arith.constant 0 : index
    %c0_19 = arith.constant 0 : index
    %28 = memref.load %arg8[%c0_18, %c0_19] : memref<1x1xf32, #tpu.memory_space<smem>>
    %29 = vector.broadcast %28 : f32 to vector<32x64xf32>
    %30 = arith.mulf %29, %27 : vector<32x64xf32>
    %31 = arith.addf %30, %3 : vector<32x64xf32>
    %c0_20 = arith.constant 0 : index
    %c0_21 = arith.constant 0 : index
    %c0_22 = arith.constant 0 : index
    %32 = vector.load %arg9[%c0_20, %c0_21, %c0_22] : memref<1x32x64xf32, #tpu.memory_space<vmem>>, vector<1x32x64xf32>
    %33 = vector.shape_cast %32 : vector<1x32x64xf32> to vector<32x64xf32>
    %34 = vector.shape_cast %31 : vector<32x64xf32> to vector<1x32x64xf32>
    tpu.vector_store %arg9[%c0_20, %c0_21, %c0_22], %34 {strides = array<i32>} : memref<1x32x64xf32, #tpu.memory_space<vmem>>, vector<1x32x64xf32>,
    %c0_23 = arith.constant 0 : index
    %c0_24 = arith.constant 0 : index
    %c0_25 = arith.constant 0 : index
    %35 = vector.load %arg10[%c0_23, %c0_24, %c0_25] : memref<1x64x64xf32, #tpu.memory_space<vmem>>, vector<1x64x64xf32>
    %36 = vector.shape_cast %35 : vector<1x64x64xf32> to vector<64x64xf32>
    %37 = vector.shape_cast %26 : vector<64x64xf32> to vector<1x64x64xf32>
    tpu.vector_store %arg10[%c0_23, %c0_24, %c0_25], %37 {strides = array<i32>} : memref<1x64x64xf32, #tpu.memory_space<vmem>>, vector<1x64x64xf32>,
    return
  }
  func.func @transform_0(%arg0: i32, %arg1: i32) -> (i32, i32, i32) {
    %c0_i32 = arith.constant 0 : i32
    %c0_i32_0 = arith.constant 0 : i32
    %c0_i32_1 = arith.constant 0 : i32
    return %arg0, %c0_i32, %c0_i32_0 : i32, i32, i32
  }
  func.func @transform_1(%arg0: i32, %arg1: i32) -> (i32, i32, i32) {
    %c0_i32 = arith.constant 0 : i32
    %c0_i32_0 = arith.constant 0 : i32
    return %arg0, %c0_i32, %arg1 : i32, i32, i32
  }
  func.func @transform_2(%arg0: i32, %arg1: i32) -> (i32, i32) {
    %c0_i32 = arith.constant 0 : i32
    %c0_i32_0 = arith.constant 0 : i32
    %c0_i32_1 = arith.constant 0 : i32
    return %c0_i32, %c0_i32_0 : i32, i32
  }
  func.func @transform_3(%arg0: i32, %arg1: i32) -> (i32, i32) {
    %c0_i32 = arith.constant 0 : i32
    %c0_i32_0 = arith.constant 0 : i32
    %c0_i32_1 = arith.constant 0 : i32
    return %c0_i32, %c0_i32_0 : i32, i32
  }
  func.func @transform_4(%arg0: i32, %arg1: i32) -> (i32, i32) {
    %c0_i32 = arith.constant 0 : i32
    %c0_i32_0 = arith.constant 0 : i32
    %c0_i32_1 = arith.constant 0 : i32
    return %c0_i32, %c0_i32_0 : i32, i32
  }
  func.func @transform_5(%arg0: i32, %arg1: i32) -> (i32, i32) {
    %c0_i32 = arith.constant 0 : i32
    %c0_i32_0 = arith.constant 0 : i32
    %c0_i32_1 = arith.constant 0 : i32
    return %c0_i32, %c0_i32_0 : i32, i32
  }
  func.func @transform_6(%arg0: i32, %arg1: i32) -> (i32, i32) {
    %c0_i32 = arith.constant 0 : i32
    %c0_i32_0 = arith.constant 0 : i32
    %c0_i32_1 = arith.constant 0 : i32
    return %c0_i32, %c0_i32_0 : i32, i32
  }
  func.func @transform_7(%arg0: i32, %arg1: i32) -> (i32, i32, i32) {
    %c0_i32 = arith.constant 0 : i32
    %c0_i32_0 = arith.constant 0 : i32
    return %arg0, %c0_i32, %arg1 : i32, i32, i32
  }
  func.func @transform_8(%arg0: i32, %arg1: i32) -> (i32, i32, i32) {
    %c0_i32 = arith.constant 0 : i32
    %c0_i32_0 = arith.constant 0 : i32
    return %arg0, %arg1, %c0_i32 : i32, i32, i32
  }
}

</mosaic_0001>

<llo_original>
// kernel: tpu_custom_call.1
$region0: #{tpu_custom_call.1}
  #allocation0 [shape = 'u32[]', space=smem, size = 0x4, offset = 0x4, fixed_abs, tag = 'smem constant byte address 0x4 - core index']
  #allocation1 [shape = 'u32[144,128]{1,0:T(1,128)}', space=vmem, size = 0x12000, scoped, tag = 'internal scratch']
  #allocation2 [shape = 'f32[1,1]{1,0:T(1,128)S(6)}', space=smem, size = 0x200, scoped, tag = 'scoped memory for tpu_custom_call.1']
  %s0 = inlined_call_operand.vmem [shape: f32[2,32,64], index: 0, kind: input, shape index: {}]
  %s1 = inlined_call_operand.vmem [shape: f32[2,32,64], index: 1, kind: input, shape index: {}]
  %s2 = inlined_call_operand.hbm [shape: f32[8,32], index: 2, kind: input, shape index: {}]
  %s3 = inlined_call_operand.vmem [shape: f32[8,1], index: 3, kind: input, shape index: {}]
  %s4 = inlined_call_operand.vmem [shape: f32[40,32], index: 4, kind: input, shape index: {}]
  %s5 = inlined_call_operand.vmem [shape: f32[40,1], index: 5, kind: input, shape index: {}]
  %s6 = inlined_call_operand.<no memory space> [shape: f32[1,1], index: 6, kind: input, shape index: {}]
  %s7 = inlined_call_operand.hbm [shape: f32[2,32,64], index: 7, kind: output, shape index: {0}]
  %s8 = inlined_call_operand.hbm [shape: f32[2,64,64], index: 8, kind: output, shape index: {1}]
  %9 = xla_tuple %s7, %s8
  %s10 = sld [smem:[#allocation0]]
  $region73: #{tpu_custom_call.1} parent=0
    _
  %s12 = ssub.s32 1, %s10
  %s13 = scalar_select 0, %s12, %s10
  %14 = sst [smem:[#allocation2]] %s6
  $region1: #{tpu_custom_call.1} parent=0
    #allocation3 [shape = 'u8[4096]{0}', space=vmem, size = 0x1000, scoped, tag = 'input window, operand 2, single buffered']
    #allocation4 [shape = 's32[2]{0}', space=sflag, size = 0x8, scoped, tag = 'scoped memory for tpu_custom_call.1']
    #allocation5 [shape = 's32[2]{0}', space=sflag, size = 0x8, scoped, tag = 'scoped memory for tpu_custom_call.1']
    #allocation6 [shape = 'u8[32768]{0}', space=vmem, size = 0x8000, scoped, tag = 'output window, operand 0']
    #allocation7 [shape = 'u8[65536]{0}', space=vmem, size = 0x10000, scoped, tag = 'output window, operand 1']
    #allocation8 [shape = 's32[2]{0}', space=sflag, size = 0x8, scoped, tag = 'scoped memory for tpu_custom_call.1']
    %15 = vsyncpa [#allocation4], 0
    %16 = vsyncpa [#allocation5], 0
    %s17 = scalar_lea.sflag [#allocation5], 1
    %18 = vsyncpa %s17, 0
    %19 = vsyncpa [#allocation8], 0
    %s20 = scalar_lea.sflag [#allocation8], 1
    %21 = vsyncpa %s20, 0
    loop: start=0, step=1, limit=4
    $region2: #{tpu_custom_call.1} parent=1 // loop_pre_header
      _
    $region3: #{tpu_custom_call.1} parent=1 // loop_header
      %s23 = sphi 0, %s27
      %p24 = scmp.ge.s32.totalorder %s23, 4
      %s30 = sphi 0, %s42
      %s31 = sphi 0, %s38
      %s32 = sphi 0, %s30
      %s33 = sphi 0, %s31
      %s34 = sphi 0, %s32
      %s35 = sphi 0, %s33
      %s45 = sphi 0, %s47
      %s48 = sphi 0, %s45
      %s49 = sphi 0, %s48
      %s65 = sphi 0, %s49
      %s73 = sphi 0, %s75
      %s76 = sphi 0, %s73
      %s77 = sphi 0, %s76
      %s93 = sphi 0, %s77
      %s97 = sphi 0, %s97
      %s99 = sphi 0, %s97
      %s100 = sphi 0, %s99
      %s114 = sphi 0, %s100
      %s118 = sphi 0, %s118
      %s120 = sphi 0, %s118
      %s121 = sphi 0, %s120
      %s135 = sphi 0, %s121
      %s139 = sphi 0, %s139
      %s141 = sphi 0, %s139
      %s142 = sphi 0, %s141
      %s156 = sphi 0, %s142
      %s160 = sphi 0, %s160
      %s162 = sphi 0, %s160
      %s163 = sphi 0, %s162
      %s177 = sphi 0, %s163
      %s181 = sphi 0, %s181
      %s183 = sphi 0, %s181
      %s184 = sphi 0, %s183
      %s198 = sphi 0, %s184
      %s206 = sphi 0, %s208
      %s209 = sphi 0, %s206
      %s210 = sphi 0, %s209
      %s226 = sphi 0, %s210
      %s234 = sphi 0, %s236
      %s237 = sphi 0, %s234
      %s238 = sphi 0, %s237
      %s254 = sphi 0, %s238
    $region4: #{tpu_custom_call.1} parent=1 // loop_header_branch
      %26 = sbr.rel (%p24) target = $region8
    $region5: #{tpu_custom_call.1} parent=1 // loop_body
      %s28 = ssub.s32 %s23, 1
      %s29 = ssub.s32 %s23, 2
      %s36 = sadd.s32 1, %s31
      %p37 = scmp.ge.s32.totalorder %s36, 1
      %s38 = scalar_select %p37, 0, %s36
      %s39 = sadd.s32 1, %s30
      %s40 = scalar_select %p37, %s39, %s30
      %p41 = scmp.ge.s32.totalorder %s40, 2
      %s42 = scalar_select %p41, 0, %s40
      %s43 = ssub.s32 %s30, %s42
      %p44 = scmp.eq.s32.totalorder %s43, 0
      %s46 = sadd.s32 %s45, 1
      %s47 = scalar_select %p44, %s45, %s46
      %p50 = pneg %p44
      %p51 = scmp.eq.s32.totalorder %s23, 1
      %p52 = por %p50, %p51
      %p53 = scmp.ne.s32.totalorder %s45, %s48
      %p54 = scmp.eq.s32.totalorder %s23, 0
      %p55 = por %p53, %p54
      %p56 = scmp.ne.s32.totalorder %s45, %s48
      %p57 = scmp.eq.s32.totalorder %s28, 1
      %p58 = por %p56, %p57
      %p59 = scmp.ne.s32.totalorder %s48, %s49
      %p60 = scmp.eq.s32.totalorder %s28, 0
      %p61 = por %p59, %p60
      %p62 = scmp.ne.s32.totalorder %s48, %s49
      %p63 = scmp.eq.s32.totalorder %s29, 1
      %p64 = por %p62, %p63
      %p66 = scmp.ne.s32.totalorder %s49, %s65
      %p67 = scmp.eq.s32.totalorder %s29, 0
      %p68 = por %p66, %p67
      %s69 = ssub.s32 %s30, %s42
      %s70 = ssub.s32 %s31, %s38
      %s71 = sor.u32 %s69, %s70
      %p72 = scmp.eq.s32.totalorder %s71, 0
      %s74 = sadd.s32 %s73, 1
      %s75 = scalar_select %p72, %s73, %s74
      %p78 = pneg %p72
      %p79 = scmp.eq.s32.totalorder %s23, 1
      %p80 = por %p78, %p79
      %p81 = scmp.ne.s32.totalorder %s73, %s76
      %p82 = scmp.eq.s32.totalorder %s23, 0
      %p83 = por %p81, %p82
      %p84 = scmp.ne.s32.totalorder %s73, %s76
      %p85 = scmp.eq.s32.totalorder %s28, 1
      %p86 = por %p84, %p85
      %p87 = scmp.ne.s32.totalorder %s76, %s77
      %p88 = scmp.eq.s32.totalorder %s28, 0
      %p89 = por %p87, %p88
      %p90 = scmp.ne.s32.totalorder %s76, %s77
      %p91 = scmp.eq.s32.totalorder %s29, 1
      %p92 = por %p90, %p91
      %p94 = scmp.ne.s32.totalorder %s77, %s93
      %p95 = scmp.eq.s32.totalorder %s29, 0
      %p96 = por %p94, %p95
      %s98 = sadd.s32 %s97, 1
      %p101 = scmp.eq.s32.totalorder %s23, 1
      %p102 = scmp.ne.s32.totalorder %s97, %s99
      %p103 = scmp.eq.s32.totalorder %s23, 0
      %p104 = por %p102, %p103
      %p105 = scmp.ne.s32.totalorder %s97, %s99
      %p106 = scmp.eq.s32.totalorder %s28, 1
      %p107 = por %p105, %p106
      %p108 = scmp.ne.s32.totalorder %s99, %s100
      %p109 = scmp.eq.s32.totalorder %s28, 0
      %p110 = por %p108, %p109
      %p111 = scmp.ne.s32.totalorder %s99, %s100
      %p112 = scmp.eq.s32.totalorder %s29, 1
      %p113 = por %p111, %p112
      %p115 = scmp.ne.s32.totalorder %s100, %s114
      %p116 = scmp.eq.s32.totalorder %s29, 0
      %p117 = por %p115, %p116
      %s119 = sadd.s32 %s118, 1
      %p122 = scmp.eq.s32.totalorder %s23, 1
      %p123 = scmp.ne.s32.totalorder %s118, %s120
      %p124 = scmp.eq.s32.totalorder %s23, 0
      %p125 = por %p123, %p124
      %p126 = scmp.ne.s32.totalorder %s118, %s120
      %p127 = scmp.eq.s32.totalorder %s28, 1
      %p128 = por %p126, %p127
      %p129 = scmp.ne.s32.totalorder %s120, %s121
      %p130 = scmp.eq.s32.totalorder %s28, 0
      %p131 = por %p129, %p130
      %p132 = scmp.ne.s32.totalorder %s120, %s121
      %p133 = scmp.eq.s32.totalorder %s29, 1
      %p134 = por %p132, %p133
      %p136 = scmp.ne.s32.totalorder %s121, %s135
      %p137 = scmp.eq.s32.totalorder %s29, 0
      %p138 = por %p136, %p137
      %s140 = sadd.s32 %s139, 1
      %p143 = scmp.eq.s32.totalorder %s23, 1
      %p144 = scmp.ne.s32.totalorder %s139, %s141
      %p145 = scmp.eq.s32.totalorder %s23, 0
      %p146 = por %p144, %p145
      %p147 = scmp.ne.s32.totalorder %s139, %s141
      %p148 = scmp.eq.s32.totalorder %s28, 1
      %p149 = por %p147, %p148
      %p150 = scmp.ne.s32.totalorder %s141, %s142
      %p151 = scmp.eq.s32.totalorder %s28, 0
      %p152 = por %p150, %p151
      %p153 = scmp.ne.s32.totalorder %s141, %s142
      %p154 = scmp.eq.s32.totalorder %s29, 1
      %p155 = por %p153, %p154
      %p157 = scmp.ne.s32.totalorder %s142, %s156
      %p158 = scmp.eq.s32.totalorder %s29, 0
      %p159 = por %p157, %p158
      %s161 = sadd.s32 %s160, 1
      %p164 = scmp.eq.s32.totalorder %s23, 1
      %p165 = scmp.ne.s32.totalorder %s160, %s162
      %p166 = scmp.eq.s32.totalorder %s23, 0
      %p167 = por %p165, %p166
      %p168 = scmp.ne.s32.totalorder %s160, %s162
      %p169 = scmp.eq.s32.totalorder %s28, 1
      %p170 = por %p168, %p169
      %p171 = scmp.ne.s32.totalorder %s162, %s163
      %p172 = scmp.eq.s32.totalorder %s28, 0
      %p173 = por %p171, %p172
      %p174 = scmp.ne.s32.totalorder %s162, %s163
      %p175 = scmp.eq.s32.totalorder %s29, 1
      %p176 = por %p174, %p175
      %p178 = scmp.ne.s32.totalorder %s163, %s177
      %p179 = scmp.eq.s32.totalorder %s29, 0
      %p180 = por %p178, %p179
      %s182 = sadd.s32 %s181, 1
      %p185 = scmp.eq.s32.totalorder %s23, 1
      %p186 = scmp.ne.s32.totalorder %s181, %s183
      %p187 = scmp.eq.s32.totalorder %s23, 0
      %p188 = por %p186, %p187
      %p189 = scmp.ne.s32.totalorder %s181, %s183
      %p190 = scmp.eq.s32.totalorder %s28, 1
      %p191 = por %p189, %p190
      %p192 = scmp.ne.s32.totalorder %s183, %s184
      %p193 = scmp.eq.s32.totalorder %s28, 0
      %p194 = por %p192, %p193
      %p195 = scmp.ne.s32.totalorder %s183, %s184
      %p196 = scmp.eq.s32.totalorder %s29, 1
      %p197 = por %p195, %p196
      %p199 = scmp.ne.s32.totalorder %s184, %s198
      %p200 = scmp.eq.s32.totalorder %s29, 0
      %p201 = por %p199, %p200
      %s202 = ssub.s32 %s30, %s42
      %s203 = ssub.s32 %s31, %s38
      %s204 = sor.u32 %s202, %s203
      %p205 = scmp.eq.s32.totalorder %s204, 0
      %s207 = sadd.s32 %s206, 1
      %s208 = scalar_select %p205, %s206, %s207
      %p211 = pneg %p205
      %p212 = scmp.eq.s32.totalorder %s23, 1
      %p213 = por %p211, %p212
      %p214 = scmp.ne.s32.totalorder %s206, %s209
      %p215 = scmp.eq.s32.totalorder %s23, 0
      %p216 = por %p214, %p215
      %p217 = scmp.ne.s32.totalorder %s206, %s209
      %p218 = scmp.eq.s32.totalorder %s28, 1
      %p219 = por %p217, %p218
      %p220 = scmp.ne.s32.totalorder %s209, %s210
      %p221 = scmp.eq.s32.totalorder %s28, 0
      %p222 = por %p220, %p221
      %p223 = scmp.ne.s32.totalorder %s209, %s210
      %p224 = scmp.eq.s32.totalorder %s29, 1
      %p225 = por %p223, %p224
      %p227 = scmp.ne.s32.totalorder %s210, %s226
      %p228 = scmp.eq.s32.totalorder %s29, 0
      %p229 = por %p227, %p228
      %s230 = ssub.s32 %s30, %s42
      %s231 = ssub.s32 %s31, %s38
      %s232 = sor.u32 %s230, %s231
      %p233 = scmp.eq.s32.totalorder %s232, 0
      %s235 = sadd.s32 %s234, 1
      %s236 = scalar_select %p233, %s234, %s235
      %p239 = pneg %p233
      %p240 = scmp.eq.s32.totalorder %s23, 1
      %p241 = por %p239, %p240
      %p242 = scmp.ne.s32.totalorder %s234, %s237
      %p243 = scmp.eq.s32.totalorder %s23, 0
      %p244 = por %p242, %p243
      %p245 = scmp.ne.s32.totalorder %s234, %s237
      %p246 = scmp.eq.s32.totalorder %s28, 1
      %p247 = por %p245, %p246
      %p248 = scmp.ne.s32.totalorder %s237, %s238
      %p249 = scmp.eq.s32.totalorder %s28, 0
      %p250 = por %p248, %p249
      %p251 = scmp.ne.s32.totalorder %s237, %s238
      %p252 = scmp.eq.s32.totalorder %s29, 1
      %p253 = por %p251, %p252
      %p255 = scmp.ne.s32.totalorder %s238, %s254
      %p256 = scmp.eq.s32.totalorder %s29, 0
      %p257 = por %p255, %p256
      %p258 = scmp.le.s32.totalorder 1, %s23
      %p259 = scmp.lt.s32.totalorder %s23, 3
      %p260 = pnand %p258, %p259
      %p261 = pneg %p260
      // Predicated region
      $region9: #{tpu_custom_call.1} parent=5 // pred_check
        _
      $region10: #{tpu_custom_call.1} parent=5 // pred_check_branch
        %263 = sbr.rel (%p260) target = $region12
      $region11: #{tpu_custom_call.1} parent=5 // pred_region
        %s264 = ssub.s32 %s23, 1
        // Predicated region
        $region13: #{tpu_custom_call.1} parent=11 // pred_check
          %p265 = pneg %p110
        $region14: #{tpu_custom_call.1} parent=11 // pred_check_branch
          %267 = sbr.rel (%p265) target = $region16
        $region15: #{tpu_custom_call.1} parent=11 // pred_region
          %s269 = ssub.s32 128, 128
          %270 = vsyncadd [#allocation4], %s269
          %s272 = sshll.u32 [#allocation3], 4
          %s273 = int_to_ptr.vmem [resolvable:$true] %s272
          %275 = dma.hbm_to_vmem [thread:$0]  %s2, 128, %s273, [#allocation4]
        $region16: #{tpu_custom_call.1} parent=11 // pred_fallthru
          _
        // Predicated region
        $region17: #{tpu_custom_call.1} parent=11 // pred_check
          %p276 = pneg %p131
        $region18: #{tpu_custom_call.1} parent=11 // pred_check_branch
          %278 = sbr.rel (%p276) target = $region20
        $region19: #{tpu_custom_call.1} parent=11 // pred_region
          _
        $region20: #{tpu_custom_call.1} parent=11 // pred_fallthru
          _
        // Predicated region
        $region21: #{tpu_custom_call.1} parent=11 // pred_check
          %p279 = pneg %p152
        $region22: #{tpu_custom_call.1} parent=11 // pred_check_branch
          %281 = sbr.rel (%p279) target = $region24
        $region23: #{tpu_custom_call.1} parent=11 // pred_region
          _
        $region24: #{tpu_custom_call.1} parent=11 // pred_fallthru
          _
        // Predicated region
        $region25: #{tpu_custom_call.1} parent=11 // pred_check
          %p282 = pneg %p173
        $region26: #{tpu_custom_call.1} parent=11 // pred_check_branch
          %284 = sbr.rel (%p282) target = $region28
        $region27: #{tpu_custom_call.1} parent=11 // pred_region
          _
        $region28: #{tpu_custom_call.1} parent=11 // pred_fallthru
          _
        // Predicated region
        $region29: #{tpu_custom_call.1} parent=11 // pred_check
          %p285 = pneg %p194
        $region30: #{tpu_custom_call.1} parent=11 // pred_check_branch
          %287 = sbr.rel (%p285) target = $region32
        $region31: #{tpu_custom_call.1} parent=11 // pred_region
          _
        $region32: #{tpu_custom_call.1} parent=11 // pred_fallthru
          _
      $region12: #{tpu_custom_call.1} parent=5 // pred_fallthru
        _
      %p288 = scmp.lt.s32.totalorder %s23, 2
      // Predicated region
      $region33: #{tpu_custom_call.1} parent=5 // pred_check
        %p289 = pneg %p288
      $region34: #{tpu_custom_call.1} parent=5 // pred_check_branch
        %291 = sbr.rel (%p289) target = $region36
      $region35: #{tpu_custom_call.1} parent=5 // pred_region
        // Predicated region
        $region37: #{tpu_custom_call.1} parent=35 // pred_check
          %p292 = pneg %p55
        $region38: #{tpu_custom_call.1} parent=35 // pred_check_branch
          %294 = sbr.rel (%p292) target = $region40
        $region39: #{tpu_custom_call.1} parent=35 // pred_region
          %p295 = scmp.lt.s32.totalorder %s30, 1
          %s296 = scalar_select %p295, %s30, 1
          %s297 = smul.addr %s296, 4
          %s298 = smul.addr %s297, 8
          %s299 = scalar_lea.vmem %s0, %s298
        $region40: #{tpu_custom_call.1} parent=35 // pred_fallthru
          _
        // Predicated region
        $region41: #{tpu_custom_call.1} parent=35 // pred_check
          %p300 = pneg %p83
        $region42: #{tpu_custom_call.1} parent=35 // pred_check_branch
          %302 = sbr.rel (%p300) target = $region44
        $region43: #{tpu_custom_call.1} parent=35 // pred_region
          %p303 = scmp.lt.s32.totalorder %s30, 1
          %s304 = scalar_select %p303, %s30, 1
          %p305 = scmp.lt.s32.totalorder %s31, 0
          %s306 = scalar_select %p305, %s31, 0
          %s307 = smul.addr %s304, 4
          %s308 = sadd.s32 %s306, %s307
          %s309 = smul.addr %s308, 8
          %s310 = scalar_lea.vmem %s1, %s309
        $region44: #{tpu_custom_call.1} parent=35 // pred_fallthru
          _
      $region36: #{tpu_custom_call.1} parent=5 // pred_fallthru
        _
      %p311 = scmp.le.s32.totalorder 1, %s23
      %p312 = scmp.lt.s32.totalorder %s23, 3
      %p313 = pnand %p311, %p312
      %p314 = pneg %p313
      // Predicated region
      $region45: #{tpu_custom_call.1} parent=5 // pred_check
        _
      $region46: #{tpu_custom_call.1} parent=5 // pred_check_branch
        %316 = sbr.rel (%p313) target = $region48
      $region47: #{tpu_custom_call.1} parent=5 // pred_region
        %s317 = ssub.s32 %s23, 1
        // Predicated region
        $region49: #{tpu_custom_call.1} parent=47 // pred_check
          %p318 = pneg %p110
        $region50: #{tpu_custom_call.1} parent=47 // pred_check_branch
          %320 = sbr.rel (%p318) target = $region52
        $region51: #{tpu_custom_call.1} parent=47 // pred_region
          %321 = dma.done [#allocation4], 128
        $region52: #{tpu_custom_call.1} parent=47 // pred_fallthru
          _
        %p322 = scmp.lt.s32.totalorder %s32, 1
        %s323 = scalar_select %p322, %s32, 1
        %s324 = smul.addr %s323, 4
        %s325 = smul.addr %s324, 8
        %s326 = scalar_lea.vmem %s0, %s325
        %p327 = pneg %p61
        %p328 = pneg %p58
        %p329 = scmp.lt.s32.totalorder %s32, 1
        %s330 = scalar_select %p329, %s32, 1
        %p331 = scmp.lt.s32.totalorder %s33, 0
        %s332 = scalar_select %p331, %s33, 0
        %s333 = smul.addr %s330, 4
        %s334 = sadd.s32 %s332, %s333
        %s335 = smul.addr %s334, 8
        %s336 = scalar_lea.vmem %s1, %s335
        %p337 = pneg %p89
        %p338 = pneg %p86
        %p339 = pneg %p110
        %p340 = pneg %p107
        %p341 = pneg %p131
        %p342 = pneg %p128
        %p343 = pneg %p152
        %p344 = pneg %p149
        %p345 = pneg %p173
        %p346 = pneg %p170
        %p347 = pneg %p194
        %p348 = pneg %p191
        %p349 = pneg %p222
        %p350 = pneg %p219
        %s351 = sand.u32 %s209, 1
        %s352 = scalar_lea.sflag [#allocation5], %s351
        %s353 = sand.u32 %s209, 1
        %s354 = smul.addr %s353, 32
        %s355 = scalar_lea.vmem [#allocation6], %s354
        %p356 = pneg %p250
        %p357 = pneg %p247
        %s358 = sand.u32 %s237, 1
        %s359 = scalar_lea.sflag [#allocation8], %s358
        %s360 = sand.u32 %s237, 1
        %s361 = smul.addr %s360, 64
        %s362 = scalar_lea.vmem [#allocation7], %s361
        %p363 = scmp.lt.s32.totalorder %s32, 1
        %s364 = scalar_select %p363, %s32, 1
        %s365 = smul.addr %s364, 4
        %s366 = smul.addr %s365, 8
        %s367 = scalar_lea.vmem %s0, %s366
        %p368 = scmp.lt.s32.totalorder %s32, 1
        %s369 = scalar_select %p368, %s32, 1
        %p370 = scmp.lt.s32.totalorder %s33, 0
        %s371 = scalar_select %p370, %s33, 0
        %s372 = smul.addr %s369, 4
        %s373 = sadd.s32 %s371, %s372
        %s374 = smul.addr %s373, 8
        %s375 = scalar_lea.vmem %s1, %s374
        %s376 = smul.u32 8, %s33
        %v377 = vld [vmem:[%s367] sm:$0xff]
        %v378 = vld [vmem:[%s367 + $0x8] sm:$0xff]
        %v379 = vld [vmem:[%s367 + $0x10] sm:$0xff]
        %v380 = vld [vmem:[%s367 + $0x18] sm:$0xff]
        %v381 = vld [vmem:[%s375] sm:$0xff]
        %v382 = vld [vmem:[%s375 + $0x8] sm:$0xff]
        %v383 = vld [vmem:[%s375 + $0x10] sm:$0xff]
        %v384 = vld [vmem:[%s375 + $0x18] sm:$0xff]
        %v385 = vld [vmem:[%s4] sm:$0xff]
        %v386 = vld [vmem:[%s4 + $0x8] sm:$0xff]
        %v387 = vld [vmem:[%s4 + $0x10] sm:$0xff]
        %v388 = vld [vmem:[%s4 + $0x18] sm:$0xff]
        %v389 = vld [vmem:[%s4 + $0x20] sm:$0xff]
        %v390 = vld [vmem:[%s5] sm:$0xff]
        %v391 = vld [vmem:[%s5 + $0x8] sm:$0xff]
        %v392 = vld [vmem:[%s5 + $0x10] sm:$0xff]
        %v393 = vld [vmem:[%s5 + $0x18] sm:$0xff]
        %v394 = vld [vmem:[%s5 + $0x20] sm:$0xff]
        %396 = vset.pattern.permute.xlu0 0
        %397 = vperm.xlu0 %396, %v390
        %v398 = vpop.permute.xlu0 %397
        %401 = vset.pattern.permute.xlu0 0
        %402 = vperm.xlu0 %401, %v391
        %v403 = vpop.permute.xlu0 %402
        %406 = vset.pattern.permute.xlu0 0
        %407 = vperm.xlu0 %406, %v392
        %v408 = vpop.permute.xlu0 %407
        %411 = vset.pattern.permute.xlu0 0
        %412 = vperm.xlu0 %411, %v393
        %v413 = vpop.permute.xlu0 %412
        %416 = vset.pattern.permute.xlu0 0
        %417 = vperm.xlu0 %416, %v394
        %v418 = vpop.permute.xlu0 %417
        %vm420 = vcmask 261120
        %v422 = vsel %vm420, %v385, 0
        %v425 = vsel %vm420, %v386, 0
        %v428 = vsel %vm420, %v387, 0
        %v431 = vsel %vm420, %v388, 0
        %v434 = vsel %vm420, %v389, 0
        %436 = vmatprep.subr.mxu0 0.0
        %437 = vmatpush1.msra.mxu0 %v377
        %438 = vmatprep.subr.mxu0 0.0
        %439 = vmatpush1.msra.mxu0 %v378
        %440 = vmatprep.subr.mxu0 0.0
        %441 = vmatpush1.msra.mxu0 %v379
        %442 = vmatprep.subr.mxu0 0.0
        %443 = vmatpush1.msra.mxu0 %v380
        %444 = vmatprep.subr.mxu0 0.0
        %445 = vmatpush1.msra.mxu0 0.0
        %446 = vmatprep.subr.mxu0 0.0
        %447 = vmatpush1.msra.mxu0 0.0
        %448 = vmatprep.subr.mxu0 0.0
        %449 = vmatpush1.msra.mxu0 0.0
        %450 = vmatprep.subr.mxu0 0.0
        %451 = vmatpush1.msra.mxu0 0.0
        %452 = vmatprep.subr.mxu0 0.0
        %453 = vmatpush1.msra.mxu0 0.0
        %454 = vmatprep.subr.mxu0 0.0
        %455 = vmatpush1.msra.mxu0 0.0
        %456 = vmatprep.subr.mxu0 0.0
        %457 = vmatpush1.msra.mxu0 0.0
        %458 = vmatprep.subr.mxu0 0.0
        %459 = vmatpush1.msra.mxu0 0.0
        %460 = vmatprep.subr.mxu0 0.0
        %461 = vmatpush1.msra.mxu0 0.0
        %462 = vmatprep.subr.mxu0 0.0
        %463 = vmatpush1.msra.mxu0 0.0
        %464 = vmatprep.subr.mxu0 0.0
        %465 = vmatpush1.msra.mxu0 0.0
        %466 = vmatprep.subr.mxu0 0.0
        %467 = vmatpush1.msra.mxu0 0.0
        %468 = vmatprep.subr.mxu0 0.0
        %469 = vmatpush1.msra.mxu0 0.0
        %470 = vmatprep.subr.mxu0 0.0
        %471 = vmatpush1.msra.mxu0 0.0
        %472 = vmatprep.subr.mxu0 0.0
        %473 = vmatpush1.msra.mxu0 0.0
        %474 = vmatprep.subr.mxu0 0.0
        %475 = vmatpush1.msra.mxu0 0.0
        %476 = vmatprep.subr.mxu0 0.0
        %477 = vmatpush1.msra.mxu0 0.0
        %478 = vmatprep.subr.mxu0 0.0
        %479 = vmatpush1.msra.mxu0 0.0
        %480 = vmatprep.subr.mxu0 0.0
        %481 = vmatpush1.msra.mxu0 0.0
        %482 = vmatprep.subr.mxu0 0.0
        %483 = vmatpush1.msra.mxu0 0.0
        %484 = vmatprep.subr.mxu0 0.0
        %485 = vmatpush1.msra.mxu0 0.0
        %486 = vmatprep.subr.mxu0 0.0
        %487 = vmatpush1.msra.mxu0 0.0
        %488 = vmatprep.subr.mxu0 0.0
        %489 = vmatpush1.msra.mxu0 0.0
        %490 = vmatprep.subr.mxu0 0.0
        %491 = vmatpush1.msra.mxu0 0.0
        %492 = vmatprep.subr.mxu0 0.0
        %493 = vmatpush1.msra.mxu0 0.0
        %494 = vmatprep.subr.mxu0 0.0
        %495 = vmatpush1.msra.mxu0 0.0
        %496 = vmatprep.subr.mxu0 0.0
        %497 = vmatpush1.msra.mxu0 0.0
        %498 = vmatprep.subr.mxu0 0.0
        %499 = vmatpush1.msra.mxu0 0.0
        %500 = vmatprep.mubr.f32.mxu0 0.0
        %501 = vmatmul.mubr.f32.gmra.mrb[0].mxu0 %v422
        %v502 = vpop.f32.mrb[0].mxu0
        %v503 = vadd.f32 %v398, %v502
        %v504 = vpop.f32.mrb[0].mxu0
        %505 = vmatprep.mubr.f32.mxu0 0.0
        %506 = vmatmul.mubr.f32.gmra.mrb[0].mxu0 %v425
        %v507 = vpop.f32.mrb[0].mxu0
        %v508 = vadd.f32 %v403, %v507
        %v509 = vpop.f32.mrb[0].mxu0
        %510 = vmatprep.mubr.f32.mxu0 0.0
        %511 = vmatmul.mubr.f32.gmra.mrb[0].mxu0 %v428
        %v512 = vpop.f32.mrb[0].mxu0
        %v513 = vadd.f32 %v408, %v512
        %v514 = vpop.f32.mrb[0].mxu0
        %515 = vmatprep.mubr.f32.mxu0 0.0
        %516 = vmatmul.mubr.f32.gmra.mrb[0].mxu0 %v431
        %v517 = vpop.f32.mrb[0].mxu0
        %v518 = vadd.f32 %v413, %v517
        %v519 = vpop.f32.mrb[0].mxu0
        %520 = vmatprep.mubr.f32.mxu0 0.0
        %521 = vmatmul.mubr.f32.gmra.mrb[0].mxu0 %v434
        %v522 = vpop.f32.mrb[0].mxu0
        %v523 = vadd.f32 %v418, %v522
        %v524 = vpop.f32.mrb[0].mxu0
        %525 = vdwg.mxu0
        %v526 = vld [vmem:[#allocation3] sm:$0xff]
        %v527 = vld [vmem:[%s3] sm:$0xff]
        %529 = vset.pattern.permute.xlu0 0
        %530 = vperm.xlu0 %529, %v527
        %v531 = vpop.permute.xlu0 %530
        %v534 = vsel %vm420, %v526, 0
        %536 = vmatprep.subr.mxu0 0.0
        %537 = vmatpush1.msra.mxu0 %v381
        %538 = vmatprep.subr.mxu0 0.0
        %539 = vmatpush1.msra.mxu0 %v382
        %540 = vmatprep.subr.mxu0 0.0
        %541 = vmatpush1.msra.mxu0 %v383
        %542 = vmatprep.subr.mxu0 0.0
        %543 = vmatpush1.msra.mxu0 %v384
        %544 = vmatprep.subr.mxu0 0.0
        %545 = vmatpush1.msra.mxu0 0.0
        %546 = vmatprep.subr.mxu0 0.0
        %547 = vmatpush1.msra.mxu0 0.0
        %548 = vmatprep.subr.mxu0 0.0
        %549 = vmatpush1.msra.mxu0 0.0
        %550 = vmatprep.subr.mxu0 0.0
        %551 = vmatpush1.msra.mxu0 0.0
        %552 = vmatprep.subr.mxu0 0.0
        %553 = vmatpush1.msra.mxu0 0.0
        %554 = vmatprep.subr.mxu0 0.0
        %555 = vmatpush1.msra.mxu0 0.0
        %556 = vmatprep.subr.mxu0 0.0
        %557 = vmatpush1.msra.mxu0 0.0
        %558 = vmatprep.subr.mxu0 0.0
        %559 = vmatpush1.msra.mxu0 0.0
        %560 = vmatprep.subr.mxu0 0.0
        %561 = vmatpush1.msra.mxu0 0.0
        %562 = vmatprep.subr.mxu0 0.0
        %563 = vmatpush1.msra.mxu0 0.0
        %564 = vmatprep.subr.mxu0 0.0
        %565 = vmatpush1.msra.mxu0 0.0
        %566 = vmatprep.subr.mxu0 0.0
        %567 = vmatpush1.msra.mxu0 0.0
        %568 = vmatprep.subr.mxu0 0.0
        %569 = vmatpush1.msra.mxu0 0.0
        %570 = vmatprep.subr.mxu0 0.0
        %571 = vmatpush1.msra.mxu0 0.0
        %572 = vmatprep.subr.mxu0 0.0
        %573 = vmatpush1.msra.mxu0 0.0
        %574 = vmatprep.subr.mxu0 0.0
        %575 = vmatpush1.msra.mxu0 0.0
        %576 = vmatprep.subr.mxu0 0.0
        %577 = vmatpush1.msra.mxu0 0.0
        %578 = vmatprep.subr.mxu0 0.0
        %579 = vmatpush1.msra.mxu0 0.0
        %580 = vmatprep.subr.mxu0 0.0
        %581 = vmatpush1.msra.mxu0 0.0
        %582 = vmatprep.subr.mxu0 0.0
        %583 = vmatpush1.msra.mxu0 0.0
        %584 = vmatprep.subr.mxu0 0.0
        %585 = vmatpush1.msra.mxu0 0.0
        %586 = vmatprep.subr.mxu0 0.0
        %587 = vmatpush1.msra.mxu0 0.0
        %588 = vmatprep.subr.mxu0 0.0
        %589 = vmatpush1.msra.mxu0 0.0
        %590 = vmatprep.subr.mxu0 0.0
        %591 = vmatpush1.msra.mxu0 0.0
        %592 = vmatprep.subr.mxu0 0.0
        %593 = vmatpush1.msra.mxu0 0.0
        %594 = vmatprep.subr.mxu0 0.0
        %595 = vmatpush1.msra.mxu0 0.0
        %596 = vmatprep.subr.mxu0 0.0
        %597 = vmatpush1.msra.mxu0 0.0
        %598 = vmatprep.subr.mxu0 0.0
        %599 = vmatpush1.msra.mxu0 0.0
        %600 = vmatprep.mubr.f32.mxu0 0.0
        %601 = vmatmul.mubr.f32.gmra.mrb[0].mxu0 %v534
        %v602 = vpop.f32.mrb[0].mxu0
        %v603 = vadd.f32 %v531, %v602
        %v604 = vpop.f32.mrb[0].mxu0
        %605 = vdwg.mxu0
        %606 = vxpose.xlu0.b32.start [1/16] %v603, 128
        %607 = vxpose.xlu0.b32.cont [2/16] 0.0, 128
        %608 = vxpose.xlu0.b32.cont [3/16] 0.0, 128
        %609 = vxpose.xlu0.b32.cont [4/16] 0.0, 128
        %610 = vxpose.xlu0.b32.cont [5/16] 0.0, 128
        %611 = vxpose.xlu0.b32.cont [6/16] 0.0, 128
        %612 = vxpose.xlu0.b32.cont [7/16] 0.0, 128
        %613 = vxpose.xlu0.b32.cont [8/16] 0.0, 128
        %614 = vxpose.xlu0.b32.cont [9/16] 0.0, 128
        %615 = vxpose.xlu0.b32.cont [10/16] 0.0, 128
        %616 = vxpose.xlu0.b32.cont [11/16] 0.0, 128
        %617 = vxpose.xlu0.b32.cont [12/16] 0.0, 128
        %618 = vxpose.xlu0.b32.cont [13/16] 0.0, 128
        %619 = vxpose.xlu0.b32.cont [14/16] 0.0, 128
        %620 = vxpose.xlu0.b32.cont [15/16] 0.0, 128
        %621 = vxpose.xlu0.b32.end [16/16] 0.0, 128
        %v622 = vpop.trf.xlu0
        %v623 = vpop.trf.xlu0
        %v624 = vpop.trf.xlu0
        %v625 = vpop.trf.xlu0
        %v626 = vpop.trf.xlu0
        %v627 = vpop.trf.xlu0
        %v628 = vpop.trf.xlu0
        %v629 = vpop.trf.xlu0
        %v630 = vpop.trf.xlu0
        %v631 = vpop.trf.xlu0
        %v632 = vpop.trf.xlu0
        %v633 = vpop.trf.xlu0
        %v634 = vpop.trf.xlu0
        %v635 = vpop.trf.xlu0
        %v636 = vpop.trf.xlu0
        %v637 = vpop.trf.xlu0
        %vm638 = vcmask 64512
        %v640 = vsel %vm638, %v622, 0
        %v643 = vsel %vm638, %v623, 0
        %v646 = vsel %vm638, %v624, 0
        %v649 = vsel %vm638, %v625, 0
        %v652 = vsel %vm638, %v626, 0
        %v655 = vsel %vm638, %v627, 0
        %v658 = vsel %vm638, %v628, 0
        %v661 = vsel %vm638, %v629, 0
        %663 = vmatprep.subr.mxu0 0.0
        %664 = vmatpush1.msra.mxu0 %v503
        %665 = vmatprep.subr.mxu0 0.0
        %666 = vmatpush1.msra.mxu0 0.0
        %667 = vmatprep.subr.mxu0 0.0
        %668 = vmatpush1.msra.mxu0 0.0
        %669 = vmatprep.subr.mxu0 0.0
        %670 = vmatpush1.msra.mxu0 0.0
        %671 = vmatprep.subr.mxu0 0.0
        %672 = vmatpush1.msra.mxu0 0.0
        %673 = vmatprep.subr.mxu0 0.0
        %674 = vmatpush1.msra.mxu0 0.0
        %675 = vmatprep.subr.mxu0 0.0
        %676 = vmatpush1.msra.mxu0 0.0
        %677 = vmatprep.subr.mxu0 0.0
        %678 = vmatpush1.msra.mxu0 0.0
        %679 = vmatprep.subr.mxu0 0.0
        %680 = vmatpush1.msra.mxu0 0.0
        %681 = vmatprep.subr.mxu0 0.0
        %682 = vmatpush1.msra.mxu0 0.0
        %683 = vmatprep.subr.mxu0 0.0
        %684 = vmatpush1.msra.mxu0 0.0
        %685 = vmatprep.subr.mxu0 0.0
        %686 = vmatpush1.msra.mxu0 0.0
        %687 = vmatprep.subr.mxu0 0.0
        %688 = vmatpush1.msra.mxu0 0.0
        %689 = vmatprep.subr.mxu0 0.0
        %690 = vmatpush1.msra.mxu0 0.0
        %691 = vmatprep.subr.mxu0 0.0
        %692 = vmatpush1.msra.mxu0 0.0
        %693 = vmatprep.subr.mxu0 0.0
        %694 = vmatpush1.msra.mxu0 0.0
        %695 = vmatprep.subr.mxu0 0.0
        %696 = vmatpush1.msra.mxu0 0.0
        %697 = vmatprep.subr.mxu0 0.0
        %698 = vmatpush1.msra.mxu0 0.0
        %699 = vmatprep.subr.mxu0 0.0
        %700 = vmatpush1.msra.mxu0 0.0
        %701 = vmatprep.subr.mxu0 0.0
        %702 = vmatpush1.msra.mxu0 0.0
        %703 = vmatprep.subr.mxu0 0.0
        %704 = vmatpush1.msra.mxu0 0.0
        %705 = vmatprep.subr.mxu0 0.0
        %706 = vmatpush1.msra.mxu0 0.0
        %707 = vmatprep.subr.mxu0 0.0
        %708 = vmatpush1.msra.mxu0 0.0
        %709 = vmatprep.subr.mxu0 0.0
        %710 = vmatpush1.msra.mxu0 0.0
        %711 = vmatprep.subr.mxu0 0.0
        %712 = vmatpush1.msra.mxu0 0.0
        %713 = vmatprep.subr.mxu0 0.0
        %714 = vmatpush1.msra.mxu0 0.0
        %715 = vmatprep.subr.mxu0 0.0
        %716 = vmatpush1.msra.mxu0 0.0
        %717 = vmatprep.subr.mxu0 0.0
        %718 = vmatpush1.msra.mxu0 0.0
        %719 = vmatprep.subr.mxu0 0.0
        %720 = vmatpush1.msra.mxu0 0.0
        %721 = vmatprep.subr.mxu0 0.0
        %722 = vmatpush1.msra.mxu0 0.0
        %723 = vmatprep.subr.mxu0 0.0
        %724 = vmatpush1.msra.mxu0 0.0
        %725 = vmatprep.subr.mxu0 0.0
        %726 = vmatpush1.msra.mxu0 0.0
        %727 = vmatprep.mubr.f32.mxu0 0.0
        %728 = vmatmul.mubr.f32.gmra.mrb[0].mxu0 %v640
        %v729 = vpop.f32.mrb[0].mxu0
        %v730 = vadd.f32 0.0, %v729
        %v731 = vpop.f32.mrb[0].mxu0
        %732 = vmatprep.mubr.f32.mxu0 0.0
        %733 = vmatmul.mubr.f32.gmra.mrb[0].mxu0 %v643
        %v734 = vpop.f32.mrb[0].mxu0
        %v735 = vadd.f32 0.0, %v734
        %v736 = vpop.f32.mrb[0].mxu0
        %737 = vmatprep.mubr.f32.mxu0 0.0
        %738 = vmatmul.mubr.f32.gmra.mrb[0].mxu0 %v646
        %v739 = vpop.f32.mrb[0].mxu0
        %v740 = vadd.f32 0.0, %v739
        %v741 = vpop.f32.mrb[0].mxu0
        %742 = vmatprep.mubr.f32.mxu0 0.0
        %743 = vmatmul.mubr.f32.gmra.mrb[0].mxu0 %v649
        %v744 = vpop.f32.mrb[0].mxu0
        %v745 = vadd.f32 0.0, %v744
        %v746 = vpop.f32.mrb[0].mxu0
        %747 = vmatprep.mubr.f32.mxu0 0.0
        %748 = vmatmul.mubr.f32.gmra.mrb[0].mxu0 %v652
        %v749 = vpop.f32.mrb[0].mxu0
        %v750 = vadd.f32 0.0, %v749
        %v751 = vpop.f32.mrb[0].mxu0
        %752 = vmatprep.mubr.f32.mxu0 0.0
        %753 = vmatmul.mubr.f32.gmra.mrb[0].mxu0 %v655
        %v754 = vpop.f32.mrb[0].mxu0
        %v755 = vadd.f32 0.0, %v754
        %v756 = vpop.f32.mrb[0].mxu0
        %757 = vmatprep.mubr.f32.mxu0 0.0
        %758 = vmatmul.mubr.f32.gmra.mrb[0].mxu0 %v658
        %v759 = vpop.f32.mrb[0].mxu0
        %v760 = vadd.f32 0.0, %v759
        %v761 = vpop.f32.mrb[0].mxu0
        %762 = vmatprep.mubr.f32.mxu0 0.0
        %763 = vmatmul.mubr.f32.gmra.mrb[0].mxu0 %v661
        %v764 = vpop.f32.mrb[0].mxu0
        %v765 = vadd.f32 0.0, %v764
        %v766 = vpop.f32.mrb[0].mxu0
        %767 = vdwg.mxu0
        %vm768 = vcmask 523264
        %v769 = vsel %vm768, %v730, -inf
        %770 = vmax.xlane.f32.xlu0 %v769
        %v771 = vpop.xlane.xlu0 %770
        %v772 = vsel %vm768, %v735, -inf
        %773 = vmax.xlane.f32.xlu0 %v772
        %v774 = vpop.xlane.xlu0 %773
        %v775 = vsel %vm768, %v740, -inf
        %776 = vmax.xlane.f32.xlu0 %v775
        %v777 = vpop.xlane.xlu0 %776
        %v778 = vsel %vm768, %v745, -inf
        %779 = vmax.xlane.f32.xlu0 %v778
        %v780 = vpop.xlane.xlu0 %779
        %v781 = vsel %vm768, %v750, -inf
        %782 = vmax.xlane.f32.xlu0 %v781
        %v783 = vpop.xlane.xlu0 %782
        %v784 = vsel %vm768, %v755, -inf
        %785 = vmax.xlane.f32.xlu0 %v784
        %v786 = vpop.xlane.xlu0 %785
        %v787 = vsel %vm768, %v760, -inf
        %788 = vmax.xlane.f32.xlu0 %v787
        %v789 = vpop.xlane.xlu0 %788
        %v790 = vsel %vm768, %v765, -inf
        %791 = vmax.xlane.f32.xlu0 %v790
        %v792 = vpop.xlane.xlu0 %791
        %v793 = vsub.f32 %v730, %v771
        %v794 = vsub.f32 %v735, %v774
        %v795 = vsub.f32 %v740, %v777
        %v796 = vsub.f32 %v745, %v780
        %v797 = vsub.f32 %v750, %v783
        %v798 = vsub.f32 %v755, %v786
        %v799 = vsub.f32 %v760, %v789
        %v800 = vsub.f32 %v765, %v792
        %v801 = vmul.f32 %v793, 1.442695
        %v802 = vpow.pop %v801
        %v803 = vmul.f32 %v794, 1.442695
        %v804 = vpow.pop %v803
        %v805 = vmul.f32 %v795, 1.442695
        %v806 = vpow.pop %v805
        %v807 = vmul.f32 %v796, 1.442695
        %v808 = vpow.pop %v807
        %v809 = vmul.f32 %v797, 1.442695
        %v810 = vpow.pop %v809
        %v811 = vmul.f32 %v798, 1.442695
        %v812 = vpow.pop %v811
        %v813 = vmul.f32 %v799, 1.442695
        %v814 = vpow.pop %v813
        %v815 = vmul.f32 %v800, 1.442695
        %v816 = vpow.pop %v815
        %v817 = vsel %vm768, %v802, 0.0
        %818 = vadd.xlane.f32.xlu0 %v817
        %v819 = vpop.xlane.xlu0 %818
        %v820 = vsel %vm768, %v804, 0.0
        %821 = vadd.xlane.f32.xlu0 %v820
        %v822 = vpop.xlane.xlu0 %821
        %v823 = vsel %vm768, %v806, 0.0
        %824 = vadd.xlane.f32.xlu0 %v823
        %v825 = vpop.xlane.xlu0 %824
        %v826 = vsel %vm768, %v808, 0.0
        %827 = vadd.xlane.f32.xlu0 %v826
        %v828 = vpop.xlane.xlu0 %827
        %v829 = vsel %vm768, %v810, 0.0
        %830 = vadd.xlane.f32.xlu0 %v829
        %v831 = vpop.xlane.xlu0 %830
        %v832 = vsel %vm768, %v812, 0.0
        %833 = vadd.xlane.f32.xlu0 %v832
        %v834 = vpop.xlane.xlu0 %833
        %v835 = vsel %vm768, %v814, 0.0
        %836 = vadd.xlane.f32.xlu0 %v835
        %v837 = vpop.xlane.xlu0 %836
        %v838 = vsel %vm768, %v816, 0.0
        %839 = vadd.xlane.f32.xlu0 %v838
        %v840 = vpop.xlane.xlu0 %839
        %v841 = vrcp.pop %v819
        %v842 = vrcp.pop %v822
        %v843 = vrcp.pop %v825
        %v844 = vrcp.pop %v828
        %v845 = vrcp.pop %v831
        %v846 = vrcp.pop %v834
        %v847 = vrcp.pop %v837
        %v848 = vrcp.pop %v840
        %v849 = vmul.f32 %v802, %v841
        %v850 = vmul.f32 %v804, %v842
        %v851 = vmul.f32 %v806, %v843
        %v852 = vmul.f32 %v808, %v844
        %v853 = vmul.f32 %v810, %v845
        %v854 = vmul.f32 %v812, %v846
        %v855 = vmul.f32 %v814, %v847
        %v856 = vmul.f32 %v816, %v848
        %v858 = vsel %vm768, %v508, 0
        %v861 = vsel %vm768, %v513, 0
        %v864 = vsel %vm768, %v518, 0
        %v867 = vsel %vm768, %v523, 0
        %v870 = vsel %vm768, %v849, 0
        %v873 = vsel %vm768, %v850, 0
        %v876 = vsel %vm768, %v851, 0
        %v879 = vsel %vm768, %v852, 0
        %v882 = vsel %vm768, %v853, 0
        %v885 = vsel %vm768, %v854, 0
        %v888 = vsel %vm768, %v855, 0
        %v891 = vsel %vm768, %v856, 0
        %893 = vmatprep.subr.mxu0 0.0
        %894 = vmatpush1.xpose.msra.mxu0 %v870
        %895 = vmatprep.subr.mxu0 0.0
        %896 = vmatpush1.xpose.msra.mxu0 %v873
        %897 = vmatprep.subr.mxu0 0.0
        %898 = vmatpush1.xpose.msra.mxu0 %v876
        %899 = vmatprep.subr.mxu0 0.0
        %900 = vmatpush1.xpose.msra.mxu0 %v879
        %901 = vmatprep.subr.mxu0 0.0
        %902 = vmatpush1.xpose.msra.mxu0 %v882
        %903 = vmatprep.subr.mxu0 0.0
        %904 = vmatpush1.xpose.msra.mxu0 %v885
        %905 = vmatprep.subr.mxu0 0.0
        %906 = vmatpush1.xpose.msra.mxu0 %v888
        %907 = vmatprep.subr.mxu0 0.0
        %908 = vmatpush1.xpose.msra.mxu0 %v891
        %909 = vmatprep.subr.mxu0 0.0
        %910 = vmatpush1.xpose.msra.mxu0 0.0
        %911 = vmatprep.subr.mxu0 0.0
        %912 = vmatpush1.xpose.msra.mxu0 0.0
        %913 = vmatprep.subr.mxu0 0.0
        %914 = vmatpush1.xpose.msra.mxu0 0.0
        %915 = vmatprep.subr.mxu0 0.0
        %916 = vmatpush1.xpose.msra.mxu0 0.0
        %917 = vmatprep.subr.mxu0 0.0
        %918 = vmatpush1.xpose.msra.mxu0 0.0
        %919 = vmatprep.subr.mxu0 0.0
        %920 = vmatpush1.xpose.msra.mxu0 0.0
        %921 = vmatprep.subr.mxu0 0.0
        %922 = vmatpush1.xpose.msra.mxu0 0.0
        %923 = vmatprep.subr.mxu0 0.0
        %924 = vmatpush1.xpose.msra.mxu0 0.0
        %925 = vmatprep.subr.mxu0 0.0
        %926 = vmatpush1.xpose.msra.mxu0 0.0
        %927 = vmatprep.subr.mxu0 0.0
        %928 = vmatpush1.xpose.msra.mxu0 0.0
        %929 = vmatprep.subr.mxu0 0.0
        %930 = vmatpush1.xpose.msra.mxu0 0.0
        %931 = vmatprep.subr.mxu0 0.0
        %932 = vmatpush1.xpose.msra.mxu0 0.0
        %933 = vmatprep.subr.mxu0 0.0
        %934 = vmatpush1.xpose.msra.mxu0 0.0
        %935 = vmatprep.subr.mxu0 0.0
        %936 = vmatpush1.xpose.msra.mxu0 0.0
        %937 = vmatprep.subr.mxu0 0.0
        %938 = vmatpush1.xpose.msra.mxu0 0.0
        %939 = vmatprep.subr.mxu0 0.0
        %940 = vmatpush1.xpose.msra.mxu0 0.0
        %941 = vmatprep.subr.mxu0 0.0
        %942 = vmatpush1.xpose.msra.mxu0 0.0
        %943 = vmatprep.subr.mxu0 0.0
        %944 = vmatpush1.xpose.msra.mxu0 0.0
        %945 = vmatprep.subr.mxu0 0.0
        %946 = vmatpush1.xpose.msra.mxu0 0.0
        %947 = vmatprep.subr.mxu0 0.0
        %948 = vmatpush1.xpose.msra.mxu0 0.0
        %949 = vmatprep.subr.mxu0 0.0
        %950 = vmatpush1.xpose.msra.mxu0 0.0
        %951 = vmatprep.subr.mxu0 0.0
        %952 = vmatpush1.xpose.msra.mxu0 0.0
        %953 = vmatprep.subr.mxu0 0.0
        %954 = vmatpush1.xpose.msra.mxu0 0.0
        %955 = vmatprep.subr.mxu0 0.0
        %956 = vmatpush1.xpose.msra.mxu0 0.0
        %957 = vmatprep.mubr.f32.mxu0 0.0
        %958 = vmatmul.mubr.f32.gmra.mrb[0].mxu0 %v858
        %v959 = vpop.f32.mrb[0].mxu0
        %v960 = vadd.f32 0.0, %v959
        %v961 = vpop.f32.mrb[0].mxu0
        %962 = vmatprep.mubr.f32.mxu0 0.0
        %963 = vmatmul.mubr.f32.gmra.mrb[0].mxu0 %v861
        %v964 = vpop.f32.mrb[0].mxu0
        %v965 = vadd.f32 0.0, %v964
        %v966 = vpop.f32.mrb[0].mxu0
        %967 = vmatprep.mubr.f32.mxu0 0.0
        %968 = vmatmul.mubr.f32.gmra.mrb[0].mxu0 %v864
        %v969 = vpop.f32.mrb[0].mxu0
        %v970 = vadd.f32 0.0, %v969
        %v971 = vpop.f32.mrb[0].mxu0
        %972 = vmatprep.mubr.f32.mxu0 0.0
        %973 = vmatmul.mubr.f32.gmra.mrb[0].mxu0 %v867
        %v974 = vpop.f32.mrb[0].mxu0
        %v975 = vadd.f32 0.0, %v974
        %v976 = vpop.f32.mrb[0].mxu0
        %977 = vdwg.mxu0
        %s978 = sld [smem:[#allocation2]]
        %v979 = vstv %s978
        %v980 = vmul.f32 %v979, %v960
        %v981 = vmul.f32 %v979, %v965
        %v982 = vmul.f32 %v979, %v970
        %v983 = vmul.f32 %v979, %v975
        %v984 = vadd.f32 %v980, %v381
        %v985 = vadd.f32 %v981, %v382
        %v986 = vadd.f32 %v982, %v383
        %v987 = vadd.f32 %v983, %v384
        %988 = vst.msk [vmem:[%s355] sm:$0xff] %vm768, %v984
        %989 = vst.msk [vmem:[%s355 + $0x8] sm:$0xff] %vm768, %v985
        %990 = vst.msk [vmem:[%s355 + $0x10] sm:$0xff] %vm768, %v986
        %991 = vst.msk [vmem:[%s355 + $0x18] sm:$0xff] %vm768, %v987
        %992 = vst.msk [vmem:[%s362] sm:$0xff] %vm768, %v849
        %993 = vst.msk [vmem:[%s362 + $0x8] sm:$0xff] %vm768, %v850
        %994 = vst.msk [vmem:[%s362 + $0x10] sm:$0xff] %vm768, %v851
        %995 = vst.msk [vmem:[%s362 + $0x18] sm:$0xff] %vm768, %v852
        %996 = vst.msk [vmem:[%s362 + $0x20] sm:$0xff] %vm768, %v853
        %997 = vst.msk [vmem:[%s362 + $0x28] sm:$0xff] %vm768, %v854
        %998 = vst.msk [vmem:[%s362 + $0x30] sm:$0xff] %vm768, %v855
        %999 = vst.msk [vmem:[%s362 + $0x38] sm:$0xff] %vm768, %v856
        %s1000 = sand.u32 %s209, 1
        %s1001 = scalar_lea.sflag [#allocation5], %s1000
        %s1002 = sand.u32 %s209, 1
        %s1003 = smul.addr %s1002, 32
        %s1004 = scalar_lea.vmem [#allocation6], %s1003
        %s1005 = sand.u32 %s237, 1
        %s1006 = scalar_lea.sflag [#allocation8], %s1005
        %s1007 = sand.u32 %s237, 1
        %s1008 = smul.addr %s1007, 64
        %s1009 = scalar_lea.vmem [#allocation7], %s1008
        // Predicated region
        $region53: #{tpu_custom_call.1} parent=47 // pred_check
          %p1010 = pneg %p219
        $region54: #{tpu_custom_call.1} parent=47 // pred_check_branch
          %1012 = sbr.rel (%p1010) target = $region56
        $region55: #{tpu_custom_call.1} parent=47 // pred_region
          %s1014 = ssub.s32 512, 512
          %1015 = vsyncadd %s1001, %s1014
          %s1016 = smul.addr %s32, 4
          %s1017 = sadd.s32 %s33, %s1016
          %s1018 = smul.addr %s1017, 128
          %s1019 = scalar_lea.hbm %s7, %s1018
          %s1020 = sshll.u32 %s1004, 4
          %s1021 = int_to_ptr.vmem [resolvable:$true] %s1020
          %1026 = dma.vmem_to_hbm [thread:$0]  %s1021, 512, %s1019, %s1001, 128, 128, 8
        $region56: #{tpu_custom_call.1} parent=47 // pred_fallthru
          _
        // Predicated region
        $region57: #{tpu_custom_call.1} parent=47 // pred_check
          %p1027 = pneg %p247
        $region58: #{tpu_custom_call.1} parent=47 // pred_check_branch
          %1029 = sbr.rel (%p1027) target = $region60
        $region59: #{tpu_custom_call.1} parent=47 // pred_region
          %s1030 = smul.u32 8, %s33
          %s1032 = ssub.s32 1024, 1024
          %1033 = vsyncadd %s1006, %s1032
          %s1034 = smul.addr %s32, 8
          %s1035 = sadd.s32 %s1030, %s1034
          %s1036 = smul.addr %s1035, 128
          %s1037 = scalar_lea.hbm %s8, %s1036
          %s1038 = sshll.u32 %s1009, 4
          %s1039 = int_to_ptr.vmem [resolvable:$true] %s1038
          %1044 = dma.vmem_to_hbm [thread:$0]  %s1039, 1024, %s1037, %s1006, 128, 128, 8
        $region60: #{tpu_custom_call.1} parent=47 // pred_fallthru
          _
      $region48: #{tpu_custom_call.1} parent=5 // pred_fallthru
        _
      %p1045 = scmp.le.s32.totalorder 2, %s23
      // Predicated region
      $region61: #{tpu_custom_call.1} parent=5 // pred_check
        %p1046 = pneg %p1045
      $region62: #{tpu_custom_call.1} parent=5 // pred_check_branch
        %1048 = sbr.rel (%p1046) target = $region64
      $region63: #{tpu_custom_call.1} parent=5 // pred_region
        %s1049 = ssub.s32 %s23, 2
        // Predicated region
        $region65: #{tpu_custom_call.1} parent=63 // pred_check
          %p1050 = pneg %p225
        $region66: #{tpu_custom_call.1} parent=63 // pred_check_branch
          %1052 = sbr.rel (%p1050) target = $region68
        $region67: #{tpu_custom_call.1} parent=63 // pred_region
          %s1053 = sand.u32 %s210, 1
          %s1054 = scalar_lea.sflag [#allocation5], %s1053
          %s1055 = sand.u32 %s210, 1
          %s1056 = smul.addr %s1055, 32
          %s1057 = scalar_lea.vmem [#allocation6], %s1056
          %1058 = dma.done %s1054, 512
        $region68: #{tpu_custom_call.1} parent=63 // pred_fallthru
          _
        // Predicated region
        $region69: #{tpu_custom_call.1} parent=63 // pred_check
          %p1059 = pneg %p253
        $region70: #{tpu_custom_call.1} parent=63 // pred_check_branch
          %1061 = sbr.rel (%p1059) target = $region72
        $region71: #{tpu_custom_call.1} parent=63 // pred_region
          %s1062 = sand.u32 %s238, 1
          %s1063 = scalar_lea.sflag [#allocation8], %s1062
          %s1064 = sand.u32 %s238, 1
          %s1065 = smul.addr %s1064, 64
          %s1066 = scalar_lea.vmem [#allocation7], %s1065
          %1067 = dma.done %s1063, 1024
        $region72: #{tpu_custom_call.1} parent=63 // pred_fallthru
          _
      $region64: #{tpu_custom_call.1} parent=5 // pred_fallthru
        _
    $region6: #{tpu_custom_call.1} parent=1 // loop_footer
      %s27 = sadd.s32 1, %s23
    $region7: #{tpu_custom_call.1} parent=1 // loop_footer_branch
      %22 = sbr.rel target = $region3
    $region8: #{tpu_custom_call.1} parent=1 // loop_exit
      _
    %1068 = vsyncpa [#allocation4], 1
    %s1069 = scalar_lea.sflag [#allocation4], 1
    %1070 = vsyncpa %s1069, 1
    %1071 = vsyncpa [#allocation5], 1
    %s1072 = scalar_lea.sflag [#allocation5], 1
    %1073 = vsyncpa %s1072, 1
    %1074 = vsyncpa [#allocation8], 1
    %s1075 = scalar_lea.sflag [#allocation8], 1
    %1076 = vsyncpa %s1075, 1

</llo_original>
